<compile_context>
chip_gen: v5e
topology: v5e:2x2
jax: 0.10.0
libtpu: 0.0.40
codegen_flags: <defaults>
</compile_context>

<pallas_src>
import jax
import jax.numpy as jnp
from jax.experimental import pallas as pl
from jax.experimental.pallas import tpu as pltpu  # noqa: F401  (TPU backend params if needed)

LANE = 128
MODULE_ORDER = ("fc1", "relu1", "fc2", "relu2", "fc3")


# ----------------------------- fused Pallas kernel ---------------------------

def _fused_mlp_kernel(x_ref, w1_ref, b1_ref, w2_ref, b2_ref, w3_ref, b3_ref,
                      h1_ref, h2_ref, h3_ref):
    # bf16 MXU operands, f32 accumulation; bias add + ReLU fused in the epilogue.
    x = x_ref[...].astype(jnp.bfloat16)

    h1 = jnp.dot(x, w1_ref[...], preferred_element_type=jnp.float32) + b1_ref[...]
    h1 = jnp.maximum(h1, 0.0)
    h1_ref[...] = h1.astype(h1_ref.dtype)

    h2 = jnp.dot(h1.astype(jnp.bfloat16), w2_ref[...],
                 preferred_element_type=jnp.float32) + b2_ref[...]
    h2 = jnp.maximum(h2, 0.0)
    h2_ref[...] = h2.astype(h2_ref.dtype)

    h3 = jnp.dot(h2.astype(jnp.bfloat16), w3_ref[...],
                 preferred_element_type=jnp.float32) + b3_ref[...]
    h3_ref[...] = h3.astype(h3_ref.dtype)


def _fused_forward(x, w1, b1, w2, b2, w3, b3):
    M, K = x.shape
    N1 = w1.shape[1]
    N2 = w2.shape[1]
    N3 = w3.shape[1]

    flops = 2 * M * (K * N1 + N1 * N2 + N2 * N3)
    bytes_accessed = (
        x.size * x.dtype.itemsize
        + sum(a.size * a.dtype.itemsize for a in (w1, b1, w2, b2, w3, b3))
        + M * (N1 + N2 + N3) * 4
    )

    return pl.pallas_call(
        _fused_mlp_kernel,
        out_shape=(
            jax.ShapeDtypeStruct((M, N1), jnp.float32),
            jax.ShapeDtypeStruct((M, N2), jnp.float32),
            jax.ShapeDtypeStruct((M, N3), jnp.float32),
        ),
        # Single grid point: every operand is one full-array VMEM block.
        in_specs=[
            pl.BlockSpec((M, K), lambda: (0, 0)),
            pl.BlockSpec((K, N1), lambda: (0, 0)),
            pl.BlockSpec((1, N1), lambda: (0, 0)),
            pl.BlockSpec((N1, N2), lambda: (0, 0)),
            pl.BlockSpec((1, N2), lambda: (0, 0)),
            pl.BlockSpec((N2, N3), lambda: (0, 0)),
            pl.BlockSpec((1, N3), lambda: (0, 0)),
        ],
        out_specs=(
            pl.BlockSpec((M, N1), lambda: (0, 0)),
            pl.BlockSpec((M, N2), lambda: (0, 0)),
            pl.BlockSpec((M, N3), lambda: (0, 0)),
        ),
        cost_estimate=pl.CostEstimate(
            flops=flops, transcendentals=0, bytes_accessed=bytes_accessed),
    )(x, w1, b1, w2, b2, w3, b3)


_fused_forward_jit = jax.jit(_fused_forward)


# ------------------------- parameter preparation (once) ----------------------

def _round_up(n, m):
    return ((n + m - 1) // m) * m


def _pad_to(a, shape):
    pads = [(0, t - s) for s, t in zip(a.shape, shape)]
    return jnp.pad(a, pads)


def prepare_params(params):
    """Zero-pad feature dims to 128 lanes (lane-dense stores) and cast weights
    to bf16 (MXU operands). Padded columns stay exactly zero through bias+ReLU,
    so padded rows of the next weight matrix contribute nothing."""
    k = params["fc1_w"].shape[0]
    n1 = params["fc1_w"].shape[1]
    n2 = params["fc2_w"].shape[1]
    n3 = params["fc3_w"].shape[1]
    N1, N2, N3 = (_round_up(n, LANE) for n in (n1, n2, n3))

    packed = (
        _pad_to(params["fc1_w"], (k, N1)).astype(jnp.bfloat16),
        _pad_to(params["fc1_b"].reshape(1, -1), (1, N1)).astype(jnp.float32),
        _pad_to(params["fc2_w"], (N1, N2)).astype(jnp.bfloat16),
        _pad_to(params["fc2_b"].reshape(1, -1), (1, N2)).astype(jnp.float32),
        _pad_to(params["fc3_w"], (N2, N3)).astype(jnp.bfloat16),
        _pad_to(params["fc3_b"].reshape(1, -1), (1, N3)).astype(jnp.float32),
    )
    return packed, (n1, n2, n3)


# --------------------------- SelectiveSequential port ------------------------

def selective_sequential(x, packed_params, logical_dims, to_select):
    """Mirrors SelectiveSequential.forward: runs the module chain (fused into one
    pallas_call) and collects (output, name), in module order, for every module
    name in `to_select`."""
    h1p, h2p, h3p = _fused_forward_jit(x, *packed_params)
    n1, n2, n3 = logical_dims
    produced = {
        "relu1": h1p[:, :n1],
        "relu2": h2p[:, :n2],
        "fc3":   h3p[:, :n3],
    }
    # TODO(synk): pre-ReLU "fc1"/"fc2" outputs are not emitted by the fused kernel
    # (not selected in this instantiation); add them as extra kernel outputs if needed.
    return [(produced[name], name) for name in MODULE_ORDER if name in to_select]


# ------------------------------------ main -----------------------------------

if __name__ == "__main__":
    key = jax.random.PRNGKey(0)
    batch, d_in, d_hid, d_out = 8, 32, 64, 16

    k = jax.random.split(key, 7)
    params = {
        "fc1_w": jax.random.normal(k[0], (d_in, d_hid), jnp.float32) * 0.1,
        "fc1_b": jax.random.normal(k[1], (d_hid,), jnp.float32) * 0.1,
        "fc2_w": jax.random.normal(k[2], (d_hid, d_hid), jnp.float32) * 0.1,
        "fc2_b": jax.random.normal(k[3], (d_hid,), jnp.float32) * 0.1,
        "fc3_w": jax.random.normal(k[4], (d_hid, d_out), jnp.float32) * 0.1,
        "fc3_b": jax.random.normal(k[5], (d_out,), jnp.float32) * 0.1,
    }
    x = jax.random.normal(k[6], (batch, d_in), jnp.float32)

    to_select = ("relu1", "relu2", "fc3")
    packed_params, logical_dims = prepare_params(params)

    outputs = selective_sequential(x, packed_params, logical_dims, to_select)
    for out, _name in outputs:
        jax.block_until_ready(out)

    # pure-JAX f32 reference of the same forward pass
    h1 = jnp.maximum(x @ params["fc1_w"] + params["fc1_b"], 0.0)
    h2 = jnp.maximum(h1 @ params["fc2_w"] + params["fc2_b"], 0.0)
    h3 = h2 @ params["fc3_w"] + params["fc3_b"]
    refs = {"relu1": h1, "relu2": h2, "fc3": h3}

    assert [name for _, name in outputs] == list(to_select)
    for out, name in outputs:
        # bf16 MXU operands (deliberate perf trade) -> looser tolerance than f32.
        assert out.shape == refs[name].shape, name
        assert jnp.allclose(out, refs[name], atol=2e-2, rtol=2e-2), name

    print("KERNEL_OK")
</pallas_src>

<mosaic_0001>
module attributes {stable_mosaic.version = 11 : i64} {
  func.func @_fused_mlp_kernel(%arg0: memref<8x32xf32, #tpu.memory_space<vmem>>, %arg1: memref<32x128xbf16, #tpu.memory_space<vmem>>, %arg2: memref<1x128xf32, #tpu.memory_space<vmem>>, %arg3: memref<128x128xbf16, #tpu.memory_space<vmem>>, %arg4: memref<1x128xf32, #tpu.memory_space<vmem>>, %arg5: memref<128x128xbf16, #tpu.memory_space<vmem>>, %arg6: memref<1x128xf32, #tpu.memory_space<vmem>>, %arg7: memref<8x128xf32, #tpu.memory_space<vmem>>, %arg8: memref<8x128xf32, #tpu.memory_space<vmem>>, %arg9: memref<8x128xf32, #tpu.memory_space<vmem>>) attributes {dimension_semantics = [], scalar_prefetch = 0 : i64, scratch_operands = 0 : i64, tpu.core_type = #tpu.core_type<tc>} {
    %c0 = arith.constant 0 : index
    %c0_0 = arith.constant 0 : index
    %0 = vector.load %arg0[%c0, %c0_0] : memref<8x32xf32, #tpu.memory_space<vmem>>, vector<8x32xf32>
    %1 = arith.truncf %0 : vector<8x32xf32> to vector<8x32xbf16>
    %c0_1 = arith.constant 0 : index
    %c0_2 = arith.constant 0 : index
    %2 = vector.load %arg1[%c0_1, %c0_2] : memref<32x128xbf16, #tpu.memory_space<vmem>>, vector<32x128xbf16>
    %cst = arith.constant dense<0.000000e+00> : vector<8x128xf32>
    %3 = tpu.matmul %1, %2, %cst {dimension_numbers = #tpu.dot_dimension_numbers<[1], [0], [0], [1], [0, 0, 1, 1], [], []>} : vector<8x32xbf16>, vector<32x128xbf16>, vector<8x128xf32> -> vector<8x128xf32>
    %c0_3 = arith.constant 0 : index
    %c0_4 = arith.constant 0 : index
    %4 = vector.load %arg2[%c0_3, %c0_4] : memref<1x128xf32, #tpu.memory_space<vmem>>, vector<1x128xf32>
    %5 = vector.broadcast %4 : vector<1x128xf32> to vector<8x128xf32>
    %6 = arith.addf %3, %5 : vector<8x128xf32>
    %cst_5 = arith.constant 0.000000e+00 : f32
    %7 = vector.broadcast %cst_5 : f32 to vector<8x128xf32>
    %8 = arith.maximumf %6, %7 : vector<8x128xf32>
    %c0_6 = arith.constant 0 : index
    %c0_7 = arith.constant 0 : index
    %9 = vector.load %arg7[%c0_6, %c0_7] : memref<8x128xf32, #tpu.memory_space<vmem>>, vector<8x128xf32>
    tpu.vector_store %arg7[%c0_6, %c0_7], %8 {strides = array<i32>} : memref<8x128xf32, #tpu.memory_space<vmem>>, vector<8x128xf32>,
    %10 = arith.truncf %8 : vector<8x128xf32> to vector<8x128xbf16>
    %c0_8 = arith.constant 0 : index
    %c0_9 = arith.constant 0 : index
    %11 = vector.load %arg3[%c0_8, %c0_9] : memref<128x128xbf16, #tpu.memory_space<vmem>>, vector<128x128xbf16>
    %cst_10 = arith.constant dense<0.000000e+00> : vector<8x128xf32>
    %12 = tpu.matmul %10, %11, %cst_10 {dimension_numbers = #tpu.dot_dimension_numbers<[1], [0], [0], [1], [0, 0, 1, 1], [], []>} : vector<8x128xbf16>, vector<128x128xbf16>, vector<8x128xf32> -> vector<8x128xf32>
    %c0_11 = arith.constant 0 : index
    %c0_12 = arith.constant 0 : index
    %13 = vector.load %arg4[%c0_11, %c0_12] : memref<1x128xf32, #tpu.memory_space<vmem>>, vector<1x128xf32>
    %14 = vector.broadcast %13 : vector<1x128xf32> to vector<8x128xf32>
    %15 = arith.addf %12, %14 : vector<8x128xf32>
    %cst_13 = arith.constant 0.000000e+00 : f32
    %16 = vector.broadcast %cst_13 : f32 to vector<8x128xf32>
    %17 = arith.maximumf %15, %16 : vector<8x128xf32>
    %c0_14 = arith.constant 0 : index
    %c0_15 = arith.constant 0 : index
    %18 = vector.load %arg8[%c0_14, %c0_15] : memref<8x128xf32, #tpu.memory_space<vmem>>, vector<8x128xf32>
    tpu.vector_store %arg8[%c0_14, %c0_15], %17 {strides = array<i32>} : memref<8x128xf32, #tpu.memory_space<vmem>>, vector<8x128xf32>,
    %19 = arith.truncf %17 : vector<8x128xf32> to vector<8x128xbf16>
    %c0_16 = arith.constant 0 : index
    %c0_17 = arith.constant 0 : index
    %20 = vector.load %arg5[%c0_16, %c0_17] : memref<128x128xbf16, #tpu.memory_space<vmem>>, vector<128x128xbf16>
    %cst_18 = arith.constant dense<0.000000e+00> : vector<8x128xf32>
    %21 = tpu.matmul %19, %20, %cst_18 {dimension_numbers = #tpu.dot_dimension_numbers<[1], [0], [0], [1], [0, 0, 1, 1], [], []>} : vector<8x128xbf16>, vector<128x128xbf16>, vector<8x128xf32> -> vector<8x128xf32>
    %c0_19 = arith.constant 0 : index
    %c0_20 = arith.constant 0 : index
    %22 = vector.load %arg6[%c0_19, %c0_20] : memref<1x128xf32, #tpu.memory_space<vmem>>, vector<1x128xf32>
    %23 = vector.broadcast %22 : vector<1x128xf32> to vector<8x128xf32>
    %24 = arith.addf %21, %23 : vector<8x128xf32>
    %c0_21 = arith.constant 0 : index
    %c0_22 = arith.constant 0 : index
    %25 = vector.load %arg9[%c0_21, %c0_22] : memref<8x128xf32, #tpu.memory_space<vmem>>, vector<8x128xf32>
    tpu.vector_store %arg9[%c0_21, %c0_22], %24 {strides = array<i32>} : memref<8x128xf32, #tpu.memory_space<vmem>>, vector<8x128xf32>,
    return
  }
}

</mosaic_0001>

<llo_original>
// kernel: _fused_forward.1
$region0: #{_fused_forward.1}
  #allocation0 [shape = 'u32[]', space=smem, size = 0x4, offset = 0x4, fixed_abs, tag = 'smem constant byte address 0x4 - core index']
  #allocation1 [shape = 'u32[72,128]{1,0:T(1,128)}', space=vmem, size = 0x9000, scoped, tag = 'internal scratch']
  %s0 = inlined_call_operand.hbm [shape: f32[8,32], index: 0, kind: input, shape index: {}]
  %s1 = inlined_call_operand.hbm [shape: bf16[32,128], index: 1, kind: input, shape index: {}]
  %s2 = inlined_call_operand.vmem [shape: f32[1,128], index: 2, kind: input, shape index: {}]
  %s3 = inlined_call_operand.hbm [shape: bf16[128,128], index: 3, kind: input, shape index: {}]
  %s4 = inlined_call_operand.vmem [shape: f32[1,128], index: 4, kind: input, shape index: {}]
  %s5 = inlined_call_operand.hbm [shape: bf16[128,128], index: 5, kind: input, shape index: {}]
  %s6 = inlined_call_operand.vmem [shape: f32[1,128], index: 6, kind: input, shape index: {}]
  %s7 = inlined_call_operand.hbm [shape: f32[8,128], index: 7, kind: output, shape index: {0}]
  %s8 = inlined_call_operand.hbm [shape: f32[8,128], index: 8, kind: output, shape index: {1}]
  %s9 = inlined_call_operand.hbm [shape: f32[8,128], index: 9, kind: output, shape index: {2}]
  %10 = xla_tuple %s7, %s8, %s9
  %s11 = sld [smem:[#allocation0]]
  $region70: #{_fused_forward.1} parent=0
    _
  %s13 = ssub.s32 1, %s11
  %s14 = scalar_select 0, %s13, %s11
  $region1: #{_fused_forward.1} parent=0
    #allocation2 [shape = 'u8[4096]{0}', space=vmem, size = 0x1000, scoped, tag = 'input window, operand 0, single buffered']
    #allocation3 [shape = 's32[1]{0}', space=sflag, size = 0x4, scoped, tag = 'scoped memory for _fused_forward.1']
    #allocation4 [shape = 's32[1]{0}', space=sflag, size = 0x4, scoped, tag = 'scoped memory for _fused_forward.1']
    #allocation5 [shape = 'u8[8192]{0}', space=vmem, size = 0x2000, scoped, tag = 'input window, operand 1, single buffered']
    #allocation6 [shape = 's32[1]{0}', space=sflag, size = 0x4, scoped, tag = 'scoped memory for _fused_forward.1']
    #allocation7 [shape = 'u8[32768]{0}', space=vmem, size = 0x8000, scoped, tag = 'input window, operand 3, single buffered']
    #allocation8 [shape = 'u8[32768]{0}', space=vmem, size = 0x8000, scoped, tag = 'input window, operand 5, single buffered']
    #allocation9 [shape = 's32[1]{0}', space=sflag, size = 0x4, scoped, tag = 'scoped memory for _fused_forward.1']
    #allocation10 [shape = 'u8[4096]{0}', space=vmem, size = 0x1000, scoped, tag = 'output window, operand 0, single buffered']
    #allocation11 [shape = 'u8[4096]{0}', space=vmem, size = 0x1000, scoped, tag = 'output window, operand 1, single buffered']
    #allocation12 [shape = 's32[1]{0}', space=sflag, size = 0x4, scoped, tag = 'scoped memory for _fused_forward.1']
    #allocation13 [shape = 'u8[4096]{0}', space=vmem, size = 0x1000, scoped, tag = 'output window, operand 2, single buffered']
    %15 = vsyncpa [#allocation3], 0
    %16 = vsyncpa [#allocation6], 0
    %17 = vsyncpa [#allocation9], 0
    %18 = vsyncpa [#allocation4], 0
    %19 = vsyncpa [#allocation12], 0
    // Predicated region
    $region2: #{_fused_forward.1} parent=1 // pred_check
      _
    $region3: #{_fused_forward.1} parent=1 // pred_check_branch
      %21 = sbr.rel (0) target = $region5
    $region4: #{_fused_forward.1} parent=1 // pred_region
      %23 = vsyncadd [#allocation3], 0
      %s25 = sshll.u32 %s0, 4
      %s26 = int_to_ptr.hbm [resolvable:$true] %s25
      %s27 = sshll.u32 [#allocation2], 4
      %s28 = int_to_ptr.vmem [resolvable:$true] %s27
      %30 = dma.hbm_to_vmem [thread:$0]  %s26, 128, %s28, [#allocation3]
    $region5: #{_fused_forward.1} parent=1 // pred_fallthru
      _
    // Predicated region
    $region6: #{_fused_forward.1} parent=1 // pred_check
      _
    $region7: #{_fused_forward.1} parent=1 // pred_check_branch
      %32 = sbr.rel (0) target = $region9
    $region8: #{_fused_forward.1} parent=1 // pred_region
      %34 = vsyncadd [#allocation6], 0
      %s35 = sshll.u32 %s1, 4
      %s36 = int_to_ptr.hbm [resolvable:$true] %s35
      %s37 = sshll.u32 [#allocation5], 4
      %s38 = int_to_ptr.vmem [resolvable:$true] %s37
      %43 = dma.hbm_to_vmem [thread:$0]  %s36, 256, %s38, [#allocation6], 64, 64, 4
    $region9: #{_fused_forward.1} parent=1 // pred_fallthru
      _
    // Predicated region
    $region10: #{_fused_forward.1} parent=1 // pred_check
      _
    $region11: #{_fused_forward.1} parent=1 // pred_check_branch
      %45 = sbr.rel (0) target = $region13
    $region12: #{_fused_forward.1} parent=1 // pred_region
      _
    $region13: #{_fused_forward.1} parent=1 // pred_fallthru
      _
    // Predicated region
    $region14: #{_fused_forward.1} parent=1 // pred_check
      _
    $region15: #{_fused_forward.1} parent=1 // pred_check_branch
      %47 = sbr.rel (0) target = $region17
    $region16: #{_fused_forward.1} parent=1 // pred_region
      %49 = vsyncadd [#allocation6], 0
      %s50 = sshll.u32 %s3, 4
      %s51 = int_to_ptr.hbm [resolvable:$true] %s50
      %s52 = sshll.u32 [#allocation7], 4
      %s53 = int_to_ptr.vmem [resolvable:$true] %s52
      %58 = dma.hbm_to_vmem [thread:$0]  %s51, 1024, %s53, [#allocation6], 64, 64, 4
    $region17: #{_fused_forward.1} parent=1 // pred_fallthru
      _
    // Predicated region
    $region18: #{_fused_forward.1} parent=1 // pred_check
      _
    $region19: #{_fused_forward.1} parent=1 // pred_check_branch
      %60 = sbr.rel (0) target = $region21
    $region20: #{_fused_forward.1} parent=1 // pred_region
      _
    $region21: #{_fused_forward.1} parent=1 // pred_fallthru
      _
    // Predicated region
    $region22: #{_fused_forward.1} parent=1 // pred_check
      _
    $region23: #{_fused_forward.1} parent=1 // pred_check_branch
      %62 = sbr.rel (0) target = $region25
    $region24: #{_fused_forward.1} parent=1 // pred_region
      %64 = vsyncadd [#allocation9], 0
      %s65 = sshll.u32 %s5, 4
      %s66 = int_to_ptr.hbm [resolvable:$true] %s65
      %s67 = sshll.u32 [#allocation8], 4
      %s68 = int_to_ptr.vmem [resolvable:$true] %s67
      %73 = dma.hbm_to_vmem [thread:$0]  %s66, 1024, %s68, [#allocation9], 64, 64, 4
    $region25: #{_fused_forward.1} parent=1 // pred_fallthru
      _
    // Predicated region
    $region26: #{_fused_forward.1} parent=1 // pred_check
      _
    $region27: #{_fused_forward.1} parent=1 // pred_check_branch
      %75 = sbr.rel (0) target = $region29
    $region28: #{_fused_forward.1} parent=1 // pred_region
      _
    $region29: #{_fused_forward.1} parent=1 // pred_fallthru
      _
    // Predicated region
    $region30: #{_fused_forward.1} parent=1 // pred_check
      _
    $region31: #{_fused_forward.1} parent=1 // pred_check_branch
      %77 = sbr.rel (0) target = $region33
    $region32: #{_fused_forward.1} parent=1 // pred_region
      %79 = dma.done [#allocation3], 128
    $region33: #{_fused_forward.1} parent=1 // pred_fallthru
      _
    // Predicated region
    $region34: #{_fused_forward.1} parent=1 // pred_check
      _
    $region35: #{_fused_forward.1} parent=1 // pred_check_branch
      %81 = sbr.rel (0) target = $region37
    $region36: #{_fused_forward.1} parent=1 // pred_region
      %83 = dma.done [#allocation6], 256
    $region37: #{_fused_forward.1} parent=1 // pred_fallthru
      _
    // Predicated region
    $region38: #{_fused_forward.1} parent=1 // pred_check
      _
    $region39: #{_fused_forward.1} parent=1 // pred_check_branch
      %85 = sbr.rel (0) target = $region41
    $region40: #{_fused_forward.1} parent=1 // pred_region
      %87 = dma.done [#allocation6], 1024
    $region41: #{_fused_forward.1} parent=1 // pred_fallthru
      _
    // Predicated region
    $region42: #{_fused_forward.1} parent=1 // pred_check
      _
    $region43: #{_fused_forward.1} parent=1 // pred_check_branch
      %89 = sbr.rel (0) target = $region45
    $region44: #{_fused_forward.1} parent=1 // pred_region
      %91 = dma.done [#allocation9], 1024
    $region45: #{_fused_forward.1} parent=1 // pred_fallthru
      _
    %v93 = vld [vmem:[#allocation2] sm:$0xff]
    %v94 = vpack.c.bf16 %v93, %v93
    %v95 = vld [vmem:[#allocation5] sm:$0xf]
    %v96 = vld [vmem:[#allocation5 + $0x4] sm:$0xf]
    %v97 = vld [vmem:[#allocation5 + $0x8] sm:$0xf]
    %v98 = vld [vmem:[#allocation5 + $0xc] sm:$0xf]
    %v99 = vld [vmem:[%s2] sm:$0x1]
    %v101 = vperm.slane %v99, 0
    %v107 = vunpack.c.l.b16 %v95
    %v108 = vunpack.c.l.b16 %v96
    %v109 = vunpack.c.l.b16 %v97
    %v110 = vunpack.c.l.b16 %v98
    %v111 = vpack.c.b16 %v108, %v107
    %v112 = vpack.c.b16 %v110, %v109
    %vm115 = vcmask 261120
    %v117 = vsel %vm115, %v94, 0
    %119 = vmatpush.bf16.msra.mxu0 0
    %120 = vmatpush.bf16.msra.mxu0 0
    %121 = vmatpush.bf16.msra.mxu0 0
    %122 = vmatpush.bf16.msra.mxu0 0
    %123 = vmatpush.bf16.msra.mxu0 0
    %124 = vmatpush.bf16.msra.mxu0 0
    %125 = vmatpush.bf16.msra.mxu0 %v112
    %126 = vmatpush.bf16.msra.mxu0 %v111
    %127 = vmatmul.bf16.gmra.mxu0 %v117
    %v128 = vpop.f32.mrf.mxu0
    %v129 = vadd.f32 %v101, %v128
    %v130 = vpop.f32.mrf.mxu0
    %131 = vdwg.mxu0
    %v132 = vmax.f32 %v129, 0.0
    %133 = vst [vmem:[#allocation10] sm:$0xff] %v132
    %v134 = vpack.c.bf16 %v132, %v132
    %v135 = vld [vmem:[#allocation7] sm:$0xf]
    %v136 = vld [vmem:[#allocation7 + $0x4] sm:$0xf]
    %v137 = vld [vmem:[#allocation7 + $0x8] sm:$0xf]
    %v138 = vld [vmem:[#allocation7 + $0xc] sm:$0xf]
    %v139 = vld [vmem:[#allocation7 + $0x10] sm:$0xf]
    %v140 = vld [vmem:[#allocation7 + $0x14] sm:$0xf]
    %v141 = vld [vmem:[#allocation7 + $0x18] sm:$0xf]
    %v142 = vld [vmem:[#allocation7 + $0x1c] sm:$0xf]
    %v143 = vld [vmem:[#allocation7 + $0x20] sm:$0xf]
    %v144 = vld [vmem:[#allocation7 + $0x24] sm:$0xf]
    %v145 = vld [vmem:[#allocation7 + $0x28] sm:$0xf]
    %v146 = vld [vmem:[#allocation7 + $0x2c] sm:$0xf]
    %v147 = vld [vmem:[#allocation7 + $0x30] sm:$0xf]
    %v148 = vld [vmem:[#allocation7 + $0x34] sm:$0xf]
    %v149 = vld [vmem:[#allocation7 + $0x38] sm:$0xf]
    %v150 = vld [vmem:[#allocation7 + $0x3c] sm:$0xf]
    %v151 = vld [vmem:[%s4] sm:$0x1]
    %v153 = vperm.slane %v151, 0
    %v171 = vunpack.c.l.b16 %v135
    %v172 = vunpack.c.l.b16 %v136
    %v173 = vunpack.c.l.b16 %v137
    %v174 = vunpack.c.l.b16 %v138
    %v175 = vunpack.c.l.b16 %v139
    %v176 = vunpack.c.l.b16 %v140
    %v177 = vunpack.c.l.b16 %v141
    %v178 = vunpack.c.l.b16 %v142
    %v179 = vunpack.c.l.b16 %v143
    %v180 = vunpack.c.l.b16 %v144
    %v181 = vunpack.c.l.b16 %v145
    %v182 = vunpack.c.l.b16 %v146
    %v183 = vunpack.c.l.b16 %v147
    %v184 = vunpack.c.l.b16 %v148
    %v185 = vunpack.c.l.b16 %v149
    %v186 = vunpack.c.l.b16 %v150
    %v187 = vpack.c.b16 %v172, %v171
    %v188 = vpack.c.b16 %v174, %v173
    %v189 = vpack.c.b16 %v176, %v175
    %v190 = vpack.c.b16 %v178, %v177
    %v191 = vpack.c.b16 %v180, %v179
    %v192 = vpack.c.b16 %v182, %v181
    %v193 = vpack.c.b16 %v184, %v183
    %v194 = vpack.c.b16 %v186, %v185
    %203 = vmatpush.bf16.msra.mxu0 %v194
    %204 = vmatpush.bf16.msra.mxu0 %v193
    %205 = vmatpush.bf16.msra.mxu0 %v192
    %206 = vmatpush.bf16.msra.mxu0 %v191
    %207 = vmatpush.bf16.msra.mxu0 %v190
    %208 = vmatpush.bf16.msra.mxu0 %v189
    %209 = vmatpush.bf16.msra.mxu0 %v188
    %210 = vmatpush.bf16.msra.mxu0 %v187
    %211 = vmatmul.bf16.gmra.mxu0 %v134
    %v212 = vpop.f32.mrf.mxu0
    %v213 = vadd.f32 %v153, %v212
    %v214 = vpop.f32.mrf.mxu0
    %215 = vdwg.mxu0
    %v216 = vmax.f32 %v213, 0.0
    %217 = vst [vmem:[#allocation11] sm:$0xff] %v216
    %v218 = vpack.c.bf16 %v216, %v216
    %v219 = vld [vmem:[#allocation8] sm:$0xf]
    %v220 = vld [vmem:[#allocation8 + $0x4] sm:$0xf]
    %v221 = vld [vmem:[#allocation8 + $0x8] sm:$0xf]
    %v222 = vld [vmem:[#allocation8 + $0xc] sm:$0xf]
    %v223 = vld [vmem:[#allocation8 + $0x10] sm:$0xf]
    %v224 = vld [vmem:[#allocation8 + $0x14] sm:$0xf]
    %v225 = vld [vmem:[#allocation8 + $0x18] sm:$0xf]
    %v226 = vld [vmem:[#allocation8 + $0x1c] sm:$0xf]
    %v227 = vld [vmem:[#allocation8 + $0x20] sm:$0xf]
    %v228 = vld [vmem:[#allocation8 + $0x24] sm:$0xf]
    %v229 = vld [vmem:[#allocation8 + $0x28] sm:$0xf]
    %v230 = vld [vmem:[#allocation8 + $0x2c] sm:$0xf]
    %v231 = vld [vmem:[#allocation8 + $0x30] sm:$0xf]
    %v232 = vld [vmem:[#allocation8 + $0x34] sm:$0xf]
    %v233 = vld [vmem:[#allocation8 + $0x38] sm:$0xf]
    %v234 = vld [vmem:[#allocation8 + $0x3c] sm:$0xf]
    %v235 = vld [vmem:[%s6] sm:$0x1]
    %v237 = vperm.slane %v235, 0
    %v255 = vunpack.c.l.b16 %v219
    %v256 = vunpack.c.l.b16 %v220
    %v257 = vunpack.c.l.b16 %v221
    %v258 = vunpack.c.l.b16 %v222
    %v259 = vunpack.c.l.b16 %v223
    %v260 = vunpack.c.l.b16 %v224
    %v261 = vunpack.c.l.b16 %v225
    %v262 = vunpack.c.l.b16 %v226
    %v263 = vunpack.c.l.b16 %v227
    %v264 = vunpack.c.l.b16 %v228
    %v265 = vunpack.c.l.b16 %v229
    %v266 = vunpack.c.l.b16 %v230
    %v267 = vunpack.c.l.b16 %v231
    %v268 = vunpack.c.l.b16 %v232
    %v269 = vunpack.c.l.b16 %v233
    %v270 = vunpack.c.l.b16 %v234
    %v271 = vpack.c.b16 %v256, %v255
    %v272 = vpack.c.b16 %v258, %v257
    %v273 = vpack.c.b16 %v260, %v259
    %v274 = vpack.c.b16 %v262, %v261
    %v275 = vpack.c.b16 %v264, %v263
    %v276 = vpack.c.b16 %v266, %v265
    %v277 = vpack.c.b16 %v268, %v267
    %v278 = vpack.c.b16 %v270, %v269
    %287 = vmatpush.bf16.msra.mxu0 %v278
    %288 = vmatpush.bf16.msra.mxu0 %v277
    %289 = vmatpush.bf16.msra.mxu0 %v276
    %290 = vmatpush.bf16.msra.mxu0 %v275
    %291 = vmatpush.bf16.msra.mxu0 %v274
    %292 = vmatpush.bf16.msra.mxu0 %v273
    %293 = vmatpush.bf16.msra.mxu0 %v272
    %294 = vmatpush.bf16.msra.mxu0 %v271
    %295 = vmatmul.bf16.gmra.mxu0 %v218
    %v296 = vpop.f32.mrf.mxu0
    %v297 = vadd.f32 %v237, %v296
    %v298 = vpop.f32.mrf.mxu0
    %299 = vdwg.mxu0
    %300 = vst [vmem:[#allocation13] sm:$0xff] %v297
    // Predicated region
    $region46: #{_fused_forward.1} parent=1 // pred_check
      _
    $region47: #{_fused_forward.1} parent=1 // pred_check_branch
      %302 = sbr.rel (0) target = $region49
    $region48: #{_fused_forward.1} parent=1 // pred_region
      %304 = vsyncadd [#allocation4], 0
      %s306 = sshll.u32 [#allocation10], 4
      %s307 = int_to_ptr.vmem [resolvable:$true] %s306
      %s308 = sshll.u32 %s7, 4
      %s309 = int_to_ptr.hbm [resolvable:$true] %s308
      %311 = dma.vmem_to_hbm [thread:$0]  %s307, 128, %s309, [#allocation4]
    $region49: #{_fused_forward.1} parent=1 // pred_fallthru
      _
    // Predicated region
    $region50: #{_fused_forward.1} parent=1 // pred_check
      _
    $region51: #{_fused_forward.1} parent=1 // pred_check_branch
      %313 = sbr.rel (0) target = $region53
    $region52: #{_fused_forward.1} parent=1 // pred_region
      %315 = vsyncadd [#allocation12], 0
      %s317 = sshll.u32 [#allocation11], 4
      %s318 = int_to_ptr.vmem [resolvable:$true] %s317
      %s319 = sshll.u32 %s8, 4
      %s320 = int_to_ptr.hbm [resolvable:$true] %s319
      %322 = dma.vmem_to_hbm [thread:$0]  %s318, 128, %s320, [#allocation12]
    $region53: #{_fused_forward.1} parent=1 // pred_fallthru
      _
    // Predicated region
    $region54: #{_fused_forward.1} parent=1 // pred_check
      _
    $region55: #{_fused_forward.1} parent=1 // pred_check_branch
      %324 = sbr.rel (0) target = $region57
    $region56: #{_fused_forward.1} parent=1 // pred_region
      %326 = vsyncadd [#allocation12], 0
      %s328 = sshll.u32 [#allocation13], 4
      %s329 = int_to_ptr.vmem [resolvable:$true] %s328
      %s330 = sshll.u32 %s9, 4
      %s331 = int_to_ptr.hbm [resolvable:$true] %s330
      %333 = dma.vmem_to_hbm [thread:$0]  %s329, 128, %s331, [#allocation12]
    $region57: #{_fused_forward.1} parent=1 // pred_fallthru
      _
    // Predicated region
    $region58: #{_fused_forward.1} parent=1 // pred_check
      _
    $region59: #{_fused_forward.1} parent=1 // pred_check_branch
      %335 = sbr.rel (0) target = $region61
    $region60: #{_fused_forward.1} parent=1 // pred_region
      %337 = dma.done [#allocation4], 128
    $region61: #{_fused_forward.1} parent=1 // pred_fallthru
      _
    // Predicated region
    $region62: #{_fused_forward.1} parent=1 // pred_check
      _
    $region63: #{_fused_forward.1} parent=1 // pred_check_branch
      %339 = sbr.rel (0) target = $region65
    $region64: #{_fused_forward.1} parent=1 // pred_region
      %341 = dma.done [#allocation12], 128
    $region65: #{_fused_forward.1} parent=1 // pred_fallthru
      _
    // Predicated region
    $region66: #{_fused_forward.1} parent=1 // pred_check
      _
    $region67: #{_fused_forward.1} parent=1 // pred_check_branch
      %343 = sbr.rel (0) target = $region69
    $region68: #{_fused_forward.1} parent=1 // pred_region
      %345 = dma.done [#allocation12], 128
    $region69: #{_fused_forward.1} parent=1 // pred_fallthru
      _
    %346 = vsyncpa [#allocation3], 1
    %347 = vsyncpa [#allocation6], 1
    %348 = vsyncpa [#allocation9], 1
    %349 = vsyncpa [#allocation4], 1
    %350 = vsyncpa [#allocation12], 1

</llo_original>
